<compile_context>
chip_gen: v6e
topology: v6e:2x2x1
jax: 0.10.0
libtpu: 0.0.40
codegen_flags: <defaults>
</compile_context>

<pallas_src>
import functools

import jax
import jax.numpy as jnp
from jax.experimental import pallas as pl
from jax.experimental.pallas import tpu as pltpu


def _bottleneck_kernel(x_ref, w_ref, gamma_ref, beta_ref, o_ref):
    """Linear (no bias — cancelled by BN) + BatchNorm1d (batch stats) + ReLU.

    x_ref:     (B, K)  flattened bottleneck features
    w_ref:     (K, N)  linear weight (stored transposed vs. torch's (N, K))
    gamma_ref: (1, N)  BN weight
    beta_ref:  (1, N)  BN bias
    o_ref:     (B, N)  output latent
    """
    # Linear: y = x @ W^T  (MXU matmul; bias omitted — see header, BN cancels it)
    y = jnp.dot(x_ref[...], w_ref[...], preferred_element_type=jnp.float32)

    # BatchNorm1d, training mode: per-feature batch mean / biased variance.
    mean = jnp.mean(y, axis=0, keepdims=True)                  # (1, N)
    centered = y - mean
    var = jnp.mean(centered * centered, axis=0, keepdims=True)  # (1, N)

    # Fold gamma into the rsqrt scale: one (B,N) multiply instead of two.
    scale = gamma_ref[...] * jax.lax.rsqrt(var + 1e-5)          # (1, N)
    y = centered * scale + beta_ref[...]

    # ReLU
    o_ref[...] = jnp.maximum(y, 0.0).astype(o_ref.dtype)


@functools.partial(jax.jit, static_argnames=("latent_size",))
def dabnet_bottleneck_forward(x_nchw, w, gamma, beta, *, latent_size):
    """Forward pass of DABNetBottleneck (bridge = identity).

    x_nchw: (B, C, H, W) float32.
    """
    B = x_nchw.shape[0]
    # Flatten exactly like torch.nn.Flatten on NCHW: (B, C*H*W), C outer, W inner.
    x2d = x_nchw.reshape(B, -1)
    N = latent_size

    vmem_spec = pl.BlockSpec(memory_space=pltpu.MemorySpace.VMEM)
    out = pl.pallas_call(
        _bottleneck_kernel,
        out_shape=jax.ShapeDtypeStruct((B, N), jnp.float32),
        in_specs=[vmem_spec, vmem_spec, vmem_spec, vmem_spec],
        out_specs=vmem_spec,
    )(x2d, w, gamma, beta)
    return out


def init_params(key, in_features, latent_size):
    """Deterministic parameter init (matches torch shapes; synthetic values)."""
    k_w, k_b = jax.random.split(key)
    limit = 1.0 / jnp.sqrt(jnp.float32(in_features))
    # torch Linear weight is (out, in); we store its transpose (in, out).
    w = jax.random.uniform(k_w, (in_features, latent_size), jnp.float32,
                           minval=-limit, maxval=limit)
    # Linear bias: kept only for the reference check — it is mathematically
    # cancelled by the training-mode BN mean subtraction, so the kernel skips it.
    b = jax.random.uniform(k_b, (1, latent_size), jnp.float32,
                           minval=-limit, maxval=limit)
    gamma = jnp.ones((1, latent_size), jnp.float32)   # BN weight init
    beta = jnp.zeros((1, latent_size), jnp.float32)   # BN bias init
    return w, b, gamma, beta


if __name__ == "__main__":
    DOWNSAMPLE_FACTOR = 32
    input_res = (64, 64)
    latent_size = 32
    bottleneck_channels = [32]

    bottleneck_h = input_res[0] // DOWNSAMPLE_FACTOR   # 2
    bottleneck_w = input_res[1] // DOWNSAMPLE_FACTOR   # 2
    C = bottleneck_channels[0]                         # 32
    B = 4                                              # >1 so batch-stat BN is defined

    key = jax.random.PRNGKey(0)
    k_x, k_p = jax.random.split(key)

    # Input to the bottleneck: encoder feature map at bottleneck resolution, NCHW.
    x = jax.random.normal(k_x, (B, C, bottleneck_h, bottleneck_w), jnp.float32)

    in_features = C * bottleneck_h * bottleneck_w      # 128
    w, b, gamma, beta = init_params(k_p, in_features, latent_size)

    out = dabnet_bottleneck_forward(x, w, gamma, beta, latent_size=latent_size)
    out = jax.block_until_ready(out)

    # Pure-JAX reference check: full module math INCLUDING the Linear bias,
    # demonstrating the bias cancellation under training-mode BN.
    x2d = x.reshape(B, -1)
    y_ref = x2d @ w + b
    m = y_ref.mean(0, keepdims=True)
    v = ((y_ref - m) ** 2).mean(0, keepdims=True)
    y_ref = jnp.maximum((y_ref - m) / jnp.sqrt(v + 1e-5) * gamma + beta, 0.0)
    assert out.shape == (B, latent_size)
    assert jnp.allclose(out, y_ref, atol=1e-4, rtol=1e-4)

    print("KERNEL_OK")
</pallas_src>

<mosaic_0001>
module attributes {stable_mosaic.version = 11 : i64} {
  func.func @_bottleneck_kernel(%arg0: memref<4x128xf32, #tpu.memory_space<vmem>>, %arg1: memref<128x32xf32, #tpu.memory_space<vmem>>, %arg2: memref<1x32xf32, #tpu.memory_space<vmem>>, %arg3: memref<1x32xf32, #tpu.memory_space<vmem>>, %arg4: memref<4x32xf32, #tpu.memory_space<vmem>>) attributes {dimension_semantics = [], scalar_prefetch = 0 : i64, scratch_operands = 0 : i64, tpu.core_type = #tpu.core_type<tc>} {
    %c0 = arith.constant 0 : index
    %c0_0 = arith.constant 0 : index
    %0 = vector.load %arg0[%c0, %c0_0] : memref<4x128xf32, #tpu.memory_space<vmem>>, vector<4x128xf32>
    %c0_1 = arith.constant 0 : index
    %c0_2 = arith.constant 0 : index
    %1 = vector.load %arg1[%c0_1, %c0_2] : memref<128x32xf32, #tpu.memory_space<vmem>>, vector<128x32xf32>
    %cst = arith.constant dense<0.000000e+00> : vector<4x32xf32>
    %2 = tpu.matmul %0, %1, %cst {dimension_numbers = #tpu.dot_dimension_numbers<[1], [0], [0], [1], [0, 0, 1, 1], [], []>} : vector<4x128xf32>, vector<128x32xf32>, vector<4x32xf32> -> vector<4x32xf32>
    %cst_3 = arith.constant dense<0.000000e+00> : vector<32xf32>
    %3 = vector.multi_reduction <add>, %2, %cst_3 [0] : vector<4x32xf32> to vector<32xf32>
    %4 = vector.shape_cast %3 : vector<32xf32> to vector<1x32xf32>
    %cst_4 = arith.constant 4.000000e+00 : f32
    %5 = vector.broadcast %cst_4 : f32 to vector<1x32xf32>
    %6 = arith.divf %4, %5 : vector<1x32xf32>
    %7 = vector.broadcast %6 : vector<1x32xf32> to vector<4x32xf32>
    %8 = arith.subf %2, %7 : vector<4x32xf32>
    %9 = arith.mulf %8, %8 : vector<4x32xf32>
    %cst_5 = arith.constant dense<0.000000e+00> : vector<32xf32>
    %10 = vector.multi_reduction <add>, %9, %cst_5 [0] : vector<4x32xf32> to vector<32xf32>
    %11 = vector.shape_cast %10 : vector<32xf32> to vector<1x32xf32>
    %cst_6 = arith.constant 4.000000e+00 : f32
    %12 = vector.broadcast %cst_6 : f32 to vector<1x32xf32>
    %13 = arith.divf %11, %12 : vector<1x32xf32>
    %c0_7 = arith.constant 0 : index
    %c0_8 = arith.constant 0 : index
    %14 = vector.load %arg2[%c0_7, %c0_8] : memref<1x32xf32, #tpu.memory_space<vmem>>, vector<1x32xf32>
    %cst_9 = arith.constant 9.99999974E-6 : f32
    %15 = vector.broadcast %cst_9 : f32 to vector<1x32xf32>
    %16 = arith.addf %13, %15 : vector<1x32xf32>
    %17 = math.rsqrt %16 : vector<1x32xf32>
    %18 = arith.mulf %14, %17 : vector<1x32xf32>
    %19 = vector.broadcast %18 : vector<1x32xf32> to vector<4x32xf32>
    %20 = arith.mulf %8, %19 : vector<4x32xf32>
    %c0_10 = arith.constant 0 : index
    %c0_11 = arith.constant 0 : index
    %21 = vector.load %arg3[%c0_10, %c0_11] : memref<1x32xf32, #tpu.memory_space<vmem>>, vector<1x32xf32>
    %22 = vector.broadcast %21 : vector<1x32xf32> to vector<4x32xf32>
    %23 = arith.addf %20, %22 : vector<4x32xf32>
    %cst_12 = arith.constant 0.000000e+00 : f32
    %24 = vector.broadcast %cst_12 : f32 to vector<4x32xf32>
    %25 = arith.maximumf %23, %24 : vector<4x32xf32>
    %c0_13 = arith.constant 0 : index
    %c0_14 = arith.constant 0 : index
    %26 = vector.load %arg4[%c0_13, %c0_14] : memref<4x32xf32, #tpu.memory_space<vmem>>, vector<4x32xf32>
    tpu.vector_store %arg4[%c0_13, %c0_14], %25 {strides = array<i32>} : memref<4x32xf32, #tpu.memory_space<vmem>>, vector<4x32xf32>,
    return
  }
}

</mosaic_0001>

<llo_original>
// kernel: dabnet_bottleneck_forward.1
$region0: #{dabnet_bottleneck_forward.1}
  #allocation0 [shape = 'u32[]', space=smem, size = 0x4, offset = 0x4, fixed_abs, tag = 'smem constant byte address 0x4 - core index']
  #allocation1 [shape = 'u32[144,128]{1,0:T(1,128)}', space=vmem, size = 0x12000, scoped, tag = 'internal scratch']
  %s0 = inlined_call_operand.vmem [shape: f32[4,128], index: 0, kind: input, shape index: {}]
  %s1 = inlined_call_operand.vmem [shape: f32[128,32], index: 1, kind: input, shape index: {}]
  %s2 = inlined_call_operand.vmem [shape: f32[1,32], index: 2, kind: input, shape index: {}]
  %s3 = inlined_call_operand.vmem [shape: f32[1,32], index: 3, kind: input, shape index: {}]
  %s4 = inlined_call_operand.hbm [shape: f32[4,32], index: 4, kind: output, shape index: {}]
  %s5 = sld [smem:[#allocation0]]
  $region26: #{dabnet_bottleneck_forward.1} parent=0
    _
  %s7 = ssub.s32 1, %s5
  %s8 = scalar_select 0, %s7, %s5
  $region1: #{dabnet_bottleneck_forward.1} parent=0
    #allocation2 [shape = 'u8[2048]{0}', space=vmem, size = 0x800, scoped, tag = 'output window, operand 0, single buffered']
    #allocation3 [shape = 's32[1]{0}', space=sflag, size = 0x4, scoped, tag = 'scoped memory for dabnet_bottleneck_forward.1']
    %9 = vsyncpa [#allocation3], 0
    // Predicated region
    $region2: #{dabnet_bottleneck_forward.1} parent=1 // pred_check
      _
    $region3: #{dabnet_bottleneck_forward.1} parent=1 // pred_check_branch
      %11 = sbr.rel (0) target = $region5
    $region4: #{dabnet_bottleneck_forward.1} parent=1 // pred_region
      _
    $region5: #{dabnet_bottleneck_forward.1} parent=1 // pred_fallthru
      _
    // Predicated region
    $region6: #{dabnet_bottleneck_forward.1} parent=1 // pred_check
      _
    $region7: #{dabnet_bottleneck_forward.1} parent=1 // pred_check_branch
      %13 = sbr.rel (0) target = $region9
    $region8: #{dabnet_bottleneck_forward.1} parent=1 // pred_region
      _
    $region9: #{dabnet_bottleneck_forward.1} parent=1 // pred_fallthru
      _
    // Predicated region
    $region10: #{dabnet_bottleneck_forward.1} parent=1 // pred_check
      _
    $region11: #{dabnet_bottleneck_forward.1} parent=1 // pred_check_branch
      %15 = sbr.rel (0) target = $region13
    $region12: #{dabnet_bottleneck_forward.1} parent=1 // pred_region
      _
    $region13: #{dabnet_bottleneck_forward.1} parent=1 // pred_fallthru
      _
    // Predicated region
    $region14: #{dabnet_bottleneck_forward.1} parent=1 // pred_check
      _
    $region15: #{dabnet_bottleneck_forward.1} parent=1 // pred_check_branch
      %17 = sbr.rel (0) target = $region17
    $region16: #{dabnet_bottleneck_forward.1} parent=1 // pred_region
      _
    $region17: #{dabnet_bottleneck_forward.1} parent=1 // pred_fallthru
      _
    %v18 = vld [vmem:[%s0] sm:$0xf]
    %v19 = vld [vmem:[%s1] sm:$0xff]
    %v20 = vld [vmem:[%s1 + $0x8] sm:$0xff]
    %v21 = vld [vmem:[%s1 + $0x10] sm:$0xff]
    %v22 = vld [vmem:[%s1 + $0x18] sm:$0xff]
    %v23 = vld [vmem:[%s1 + $0x20] sm:$0xff]
    %v24 = vld [vmem:[%s1 + $0x28] sm:$0xff]
    %v25 = vld [vmem:[%s1 + $0x30] sm:$0xff]
    %v26 = vld [vmem:[%s1 + $0x38] sm:$0xff]
    %v27 = vld [vmem:[%s1 + $0x40] sm:$0xff]
    %v28 = vld [vmem:[%s1 + $0x48] sm:$0xff]
    %v29 = vld [vmem:[%s1 + $0x50] sm:$0xff]
    %v30 = vld [vmem:[%s1 + $0x58] sm:$0xff]
    %v31 = vld [vmem:[%s1 + $0x60] sm:$0xff]
    %v32 = vld [vmem:[%s1 + $0x68] sm:$0xff]
    %v33 = vld [vmem:[%s1 + $0x70] sm:$0xff]
    %v34 = vld [vmem:[%s1 + $0x78] sm:$0xff]
    %35 = vmatprep.subr.mxu0 0.0
    %36 = vmatpush1.msra.mxu0 %v34
    %37 = vmatprep.subr.mxu0 0.0
    %38 = vmatpush1.msra.mxu0 %v33
    %39 = vmatprep.subr.mxu0 0.0
    %40 = vmatpush1.msra.mxu0 %v32
    %41 = vmatprep.subr.mxu0 0.0
    %42 = vmatpush1.msra.mxu0 %v31
    %43 = vmatprep.subr.mxu0 0.0
    %44 = vmatpush1.msra.mxu0 %v30
    %45 = vmatprep.subr.mxu0 0.0
    %46 = vmatpush1.msra.mxu0 %v29
    %47 = vmatprep.subr.mxu0 0.0
    %48 = vmatpush1.msra.mxu0 %v28
    %49 = vmatprep.subr.mxu0 0.0
    %50 = vmatpush1.msra.mxu0 %v27
    %51 = vmatprep.subr.mxu0 0.0
    %52 = vmatpush1.msra.mxu0 %v26
    %53 = vmatprep.subr.mxu0 0.0
    %54 = vmatpush1.msra.mxu0 %v25
    %55 = vmatprep.subr.mxu0 0.0
    %56 = vmatpush1.msra.mxu0 %v24
    %57 = vmatprep.subr.mxu0 0.0
    %58 = vmatpush1.msra.mxu0 %v23
    %59 = vmatprep.subr.mxu0 0.0
    %60 = vmatpush1.msra.mxu0 %v22
    %61 = vmatprep.subr.mxu0 0.0
    %62 = vmatpush1.msra.mxu0 %v21
    %63 = vmatprep.subr.mxu0 0.0
    %64 = vmatpush1.msra.mxu0 %v20
    %65 = vmatprep.subr.mxu0 0.0
    %66 = vmatpush1.msra.mxu0 %v19
    %67 = vmatprep.subr.mxu0 0.0
    %68 = vmatpush2.msra.mxu0 0.0
    %69 = vmatprep.subr.mxu0 0.0
    %70 = vmatpush2.msra.mxu0 0.0
    %71 = vmatprep.subr.mxu0 0.0
    %72 = vmatpush2.msra.mxu0 0.0
    %73 = vmatprep.subr.mxu0 0.0
    %74 = vmatpush2.msra.mxu0 0.0
    %75 = vmatprep.subr.mxu0 0.0
    %76 = vmatpush2.msra.mxu0 0.0
    %77 = vmatprep.subr.mxu0 0.0
    %78 = vmatpush2.msra.mxu0 0.0
    %79 = vmatprep.subr.mxu0 0.0
    %80 = vmatpush2.msra.mxu0 0.0
    %81 = vmatprep.subr.mxu0 0.0
    %82 = vmatpush2.msra.mxu0 0.0
    %83 = vmatprep.subr.mxu0 0.0
    %84 = vmatpush2.msra.mxu0 0.0
    %85 = vmatprep.subr.mxu0 0.0
    %86 = vmatpush2.msra.mxu0 0.0
    %87 = vmatprep.subr.mxu0 0.0
    %88 = vmatpush2.msra.mxu0 0.0
    %89 = vmatprep.subr.mxu0 0.0
    %90 = vmatpush2.msra.mxu0 0.0
    %91 = vmatprep.subr.mxu0 0.0
    %92 = vmatpush2.msra.mxu0 0.0
    %93 = vmatprep.subr.mxu0 0.0
    %94 = vmatpush2.msra.mxu0 0.0
    %95 = vmatprep.subr.mxu0 0.0
    %96 = vmatpush2.msra.mxu0 0.0
    %97 = vmatprep.subr.mxu0 0.0
    %98 = vmatpush2.msra.mxu0 0.0
    %99 = vmatprep.mubr.f32.mxu0 0.0
    %100 = vmatmul.mubr.f32.gmra.mxu0 %v18
    %v101 = vpop.f32.mrf.mxu0
    %v102 = vadd.f32 0.0, %v101
    %v103 = vpop.f32.mrf.mxu0
    %104 = vdwg.mxu0
    %vm105 = vcmask 257024
    %v106 = vsel %vm105, %v102, 0.0
    %v107 = vrot.slane %v106, 4
    %v108 = vadd.f32 %v106, %v107
    %v109 = vrot.slane %v108, 2
    %v110 = vadd.f32 %v108, %v109
    %v111 = vrot.slane %v110, 1
    %v112 = vadd.f32 %v110, %v111
    %v113 = vrcp.pop 4.0
    %v114 = vmul.f32 %v112, %v113
    %v115 = vsub.f32 %v102, %v114
    %v116 = vmul.f32 %v115, %v115
    %v117 = vsel %vm105, %v116, 0.0
    %v118 = vrot.slane %v117, 4
    %v119 = vadd.f32 %v117, %v118
    %v120 = vrot.slane %v119, 2
    %v121 = vadd.f32 %v119, %v120
    %v122 = vrot.slane %v121, 1
    %v123 = vadd.f32 %v121, %v122
    %v124 = vmul.f32 %v123, %v113
    %v125 = vld [vmem:[%s2] sm:$0x1]
    %v126 = vadd.f32 %v124, 1e-05
    %v127 = vrsqrt.pop %v126
    %v128 = vmul.f32 %v125, %v127
    %v130 = vlaneseq
    %v131 = vshrl.u32 %v130, 7
    %v132 = vsub.s32 0, %v131
    %v133 = vrot.slane %v128, %v132
    %v135 = vmul.f32 %v115, %v133
    %v136 = vld [vmem:[%s3] sm:$0x1]
    %v138 = vlaneseq
    %v139 = vshrl.u32 %v138, 7
    %v140 = vsub.s32 0, %v139
    %v141 = vrot.slane %v136, %v140
    %v143 = vadd.f32 %v135, %v141
    %v144 = vmax.f32 %v143, 0.0
    %145 = vst.msk [vmem:[#allocation2] sm:$0xf] %vm105, %v144
    // Predicated region
    $region18: #{dabnet_bottleneck_forward.1} parent=1 // pred_check
      _
    $region19: #{dabnet_bottleneck_forward.1} parent=1 // pred_check_branch
      %147 = sbr.rel (0) target = $region21
    $region20: #{dabnet_bottleneck_forward.1} parent=1 // pred_region
      %s149 = ssub.s32 64, 64
      %150 = vsyncadd [#allocation3], %s149
      %s152 = sshll.u32 [#allocation2], 4
      %s153 = int_to_ptr.vmem [resolvable:$true] %s152
      %155 = dma.vmem_to_hbm [thread:$0]  %s153, 64, %s4, [#allocation3]
    $region21: #{dabnet_bottleneck_forward.1} parent=1 // pred_fallthru
      _
    // Predicated region
    $region22: #{dabnet_bottleneck_forward.1} parent=1 // pred_check
      _
    $region23: #{dabnet_bottleneck_forward.1} parent=1 // pred_check_branch
      %157 = sbr.rel (0) target = $region25
    $region24: #{dabnet_bottleneck_forward.1} parent=1 // pred_region
      %158 = dma.done [#allocation3], 64
    $region25: #{dabnet_bottleneck_forward.1} parent=1 // pred_fallthru
      _
    %159 = vsyncpa [#allocation3], 1

</llo_original>
